<compile_context>
chip_gen: v5e
topology: v5e:2x2
jax: 0.10.0
libtpu: 0.0.40
codegen_flags: <defaults>
</compile_context>

<pallas_src>
import jax
import jax.numpy as jnp
from jax.experimental import pallas as pl
from jax.experimental.pallas import tpu as pltpu


def _linreg_kernel(b_ref, w_ref, x_ref, o_ref):
    # b_ref, w_ref live in SMEM (shape (1,)); x_ref / o_ref are VMEM tiles.
    b = b_ref[0]
    w = w_ref[0]
    x = x_ref[...].astype(jnp.float32)          # upcast in-kernel (free filler, VPU)
    o_ref[...] = (b + w * x).astype(o_ref.dtype)  # write back in the original dtype


def _pick_lane(n):
    """Widest lane count (multiple of 128) that divides n, else None (pad path)."""
    for lane in (4096, 2048, 1024, 512, 256, 128):
        if n % lane == 0:
            return lane
    return None


def ece655_linreg(x, b, w):
    """Compute b + w * x with a Pallas TPU kernel.

    x: any-shape array. b, w: shape (1,) f32 parameters (nn.Parameter(torch.randn(1))).
    """
    orig_shape = x.shape
    orig_dtype = x.dtype
    n = x.size

    lane = _pick_lane(n)
    if lane is None:
        # Rare ragged path: pad the flat tail up to a multiple of 128 once.
        lane = 128
        pad = (-n) % lane
        x_flat = jnp.pad(jnp.ravel(x), (0, pad))
        padded = True
    else:
        # Fast path: pure reshape (no copy), no pad, no trailing slice.
        x_flat = jnp.ravel(x)
        padded = False

    rows = x_flat.size // lane
    x2d = x_flat.reshape(rows, lane)

    # Target ~1 MiB f32 per block (256K elements). Double-buffered in + out
    # => ~4 MiB VMEM: fits v5e (16 MiB scoped), v6e/v7x (32 MiB scoped) with headroom.
    target_elems = 1 << 18
    target_rows = max(1, target_elems // lane)
    if target_rows >= rows:
        block_rows = rows                      # whole row extent in one block
    else:
        block_rows = max(8, (target_rows // 8) * 8)  # keep (8,128)-aligned sub-blocks

    grid = (pl.cdiv(rows, block_rows),)

    itemsize = jnp.dtype(orig_dtype).itemsize
    cost = pl.CostEstimate(
        flops=2 * n,
        transcendentals=0,
        bytes_accessed=2 * itemsize * n,
    )

    out2d = pl.pallas_call(
        _linreg_kernel,
        out_shape=jax.ShapeDtypeStruct((rows, lane), orig_dtype),
        grid=grid,
        in_specs=[
            pl.BlockSpec(memory_space=pltpu.SMEM),                 # b (scalar param)
            pl.BlockSpec(memory_space=pltpu.SMEM),                 # w (scalar param)
            pl.BlockSpec((block_rows, lane), lambda i: (i, 0)),    # x tile
        ],
        out_specs=pl.BlockSpec((block_rows, lane), lambda i: (i, 0)),
        compiler_params=pltpu.CompilerParams(
            dimension_semantics=("parallel",),   # shards grid across v7x's 2 TCs
        ),
        cost_estimate=cost,
    )(b.astype(jnp.float32), w.astype(jnp.float32), x2d)

    if padded:
        out = out2d.reshape(-1)[:n].reshape(orig_shape)
    else:
        out = out2d.reshape(orig_shape)
    return out


if __name__ == "__main__":
    key = jax.random.PRNGKey(0)
    kx, kb, kw, kx2 = jax.random.split(key, 4)

    # Deterministic "parameters" (nn.Parameter(torch.randn(1)) shapes).
    b = jax.random.normal(kb, (1,), dtype=jnp.float32)
    w = jax.random.normal(kw, (1,), dtype=jnp.float32)

    # Small input, arbitrary shape (the module is purely elementwise).
    x = jax.random.normal(kx, (2, 4, 16, 16), dtype=jnp.float32)

    y = ece655_linreg(x, b, w)
    y = jax.block_until_ready(y)

    # Reference check in plain JAX.
    y_ref = b[0] + w[0] * x
    assert y.shape == x.shape and y.dtype == x.dtype
    assert jnp.allclose(y, y_ref, atol=1e-6, rtol=1e-6)

    # Also exercise the ragged (pad) fallback path once, on a tiny odd shape.
    x2 = jax.random.normal(kx2, (3, 5, 7), dtype=jnp.float32)
    y2 = jax.block_until_ready(ece655_linreg(x2, b, w))
    assert y2.shape == x2.shape
    assert jnp.allclose(y2, b[0] + w[0] * x2, atol=1e-6, rtol=1e-6)

    print("KERNEL_OK")
</pallas_src>

<mosaic_0001>
module attributes {stable_mosaic.version = 11 : i64} {
  func.func @_linreg_kernel(%arg0: i32, %arg1: memref<1xf32, #tpu.memory_space<smem>>, %arg2: memref<1xf32, #tpu.memory_space<smem>>, %arg3: memref<1x2048xf32, #tpu.memory_space<vmem>>, %arg4: memref<1x2048xf32, #tpu.memory_space<vmem>>) attributes {dimension_semantics = [#tpu.dimension_semantics<parallel>], iteration_bounds = array<i64: 1>, scalar_prefetch = 0 : i64, scratch_operands = 0 : i64, tpu.core_type = #tpu.core_type<tc>, window_params = [{transform_indices = @transform_0, window_bounds = array<i64: 1>}, {transform_indices = @transform_1, window_bounds = array<i64: 1>}, {transform_indices = @transform_2, window_bounds = array<i64: 1, 2048>}, {transform_indices = @transform_3, window_bounds = array<i64: 1, 2048>}]} {
    %c0 = arith.constant 0 : index
    %0 = memref.load %arg1[%c0] : memref<1xf32, #tpu.memory_space<smem>>
    %c0_0 = arith.constant 0 : index
    %1 = memref.load %arg2[%c0_0] : memref<1xf32, #tpu.memory_space<smem>>
    %c0_1 = arith.constant 0 : index
    %c0_2 = arith.constant 0 : index
    %2 = vector.load %arg3[%c0_1, %c0_2] : memref<1x2048xf32, #tpu.memory_space<vmem>>, vector<1x2048xf32>
    %3 = vector.broadcast %1 : f32 to vector<1x2048xf32>
    %4 = arith.mulf %3, %2 : vector<1x2048xf32>
    %5 = vector.broadcast %0 : f32 to vector<1x2048xf32>
    %6 = arith.addf %5, %4 : vector<1x2048xf32>
    %c0_3 = arith.constant 0 : index
    %c0_4 = arith.constant 0 : index
    %7 = vector.load %arg4[%c0_3, %c0_4] : memref<1x2048xf32, #tpu.memory_space<vmem>>, vector<1x2048xf32>
    tpu.vector_store %arg4[%c0_3, %c0_4], %6 {strides = array<i32>} : memref<1x2048xf32, #tpu.memory_space<vmem>>, vector<1x2048xf32>,
    return
  }
  func.func @transform_0(%arg0: i32) -> i32 {
    %c0_i32 = arith.constant 0 : i32
    %c0_i32_0 = arith.constant 0 : i32
    return %c0_i32 : i32
  }
  func.func @transform_1(%arg0: i32) -> i32 {
    %c0_i32 = arith.constant 0 : i32
    %c0_i32_0 = arith.constant 0 : i32
    return %c0_i32 : i32
  }
  func.func @transform_2(%arg0: i32) -> (i32, i32) {
    %c0_i32 = arith.constant 0 : i32
    %c0_i32_0 = arith.constant 0 : i32
    return %arg0, %c0_i32 : i32, i32
  }
  func.func @transform_3(%arg0: i32) -> (i32, i32) {
    %c0_i32 = arith.constant 0 : i32
    %c0_i32_0 = arith.constant 0 : i32
    return %arg0, %c0_i32 : i32, i32
  }
}

</mosaic_0001>

<llo_original>
// kernel: tpu_custom_call.1
$region0: #{tpu_custom_call.1}
  #allocation0 [shape = 'u32[]', space=smem, size = 0x4, offset = 0x4, fixed_abs, tag = 'smem constant byte address 0x4 - core index']
  #allocation1 [shape = 'u32[72,128]{1,0:T(1,128)}', space=vmem, size = 0x9000, scoped, tag = 'internal scratch']
  #allocation2 [shape = 'f32[1]{0:T(128)S(6)}', space=smem, size = 0x200, scoped, tag = 'scoped memory for tpu_custom_call.1']
  #allocation3 [shape = 'f32[1]{0:T(128)S(6)}', space=smem, size = 0x200, scoped, tag = 'scoped memory for tpu_custom_call.1']
  %s0 = inlined_call_operand.<no memory space> [shape: f32[1], index: 0, kind: input, shape index: {}]
  %s1 = inlined_call_operand.<no memory space> [shape: f32[1], index: 1, kind: input, shape index: {}]
  %s2 = inlined_call_operand.hbm [shape: f32[1,2048], index: 2, kind: input, shape index: {}]
  %s3 = inlined_call_operand.hbm [shape: f32[1,2048], index: 3, kind: output, shape index: {}]
  %s4 = sld [smem:[#allocation0]]
  $region26: #{tpu_custom_call.1} parent=0
    _
  %s6 = ssub.s32 1, %s4
  %s7 = scalar_select 0, %s6, %s4
  %8 = sst [smem:[#allocation2]] %s0
  %9 = sst [smem:[#allocation3]] %s1
  $region1: #{tpu_custom_call.1} parent=0
    #allocation4 [shape = 'u8[8192]{0}', space=vmem, size = 0x2000, scoped, tag = 'input window, operand 2, single buffered']
    #allocation5 [shape = 's32[1]{0}', space=sflag, size = 0x4, scoped, tag = 'scoped memory for tpu_custom_call.1']
    #allocation6 [shape = 's32[1]{0}', space=sflag, size = 0x4, scoped, tag = 'scoped memory for tpu_custom_call.1']
    #allocation7 [shape = 'u8[8192]{0}', space=vmem, size = 0x2000, scoped, tag = 'output window, operand 0, single buffered']
    %10 = vsyncpa [#allocation5], 0
    %11 = vsyncpa [#allocation6], 0
    // Predicated region
    $region2: #{tpu_custom_call.1} parent=1 // pred_check
      _
    $region3: #{tpu_custom_call.1} parent=1 // pred_check_branch
      %13 = sbr.rel (0) target = $region5
    $region4: #{tpu_custom_call.1} parent=1 // pred_region
      _
    $region5: #{tpu_custom_call.1} parent=1 // pred_fallthru
      _
    // Predicated region
    $region6: #{tpu_custom_call.1} parent=1 // pred_check
      _
    $region7: #{tpu_custom_call.1} parent=1 // pred_check_branch
      %15 = sbr.rel (0) target = $region9
    $region8: #{tpu_custom_call.1} parent=1 // pred_region
      _
    $region9: #{tpu_custom_call.1} parent=1 // pred_fallthru
      _
    // Predicated region
    $region10: #{tpu_custom_call.1} parent=1 // pred_check
      _
    $region11: #{tpu_custom_call.1} parent=1 // pred_check_branch
      %17 = sbr.rel (0) target = $region13
    $region12: #{tpu_custom_call.1} parent=1 // pred_region
      %19 = vsyncadd [#allocation5], 0
      %s21 = sshll.u32 %s2, 4
      %s22 = int_to_ptr.hbm [resolvable:$true] %s21
      %s23 = sshll.u32 [#allocation4], 4
      %s24 = int_to_ptr.vmem [resolvable:$true] %s23
      %26 = dma.hbm_to_vmem [thread:$0]  %s22, 256, %s24, [#allocation5]
    $region13: #{tpu_custom_call.1} parent=1 // pred_fallthru
      _
    // Predicated region
    $region14: #{tpu_custom_call.1} parent=1 // pred_check
      _
    $region15: #{tpu_custom_call.1} parent=1 // pred_check_branch
      %28 = sbr.rel (0) target = $region17
    $region16: #{tpu_custom_call.1} parent=1 // pred_region
      %30 = dma.done [#allocation5], 256
    $region17: #{tpu_custom_call.1} parent=1 // pred_fallthru
      _
    %s31 = sld [smem:[#allocation2]]
    %s32 = sld [smem:[#allocation3]]
    %v33 = vld [vmem:[#allocation4] sm:$0xff]
    %v34 = vld [vmem:[#allocation4 + $0x8] sm:$0xff]
    %v35 = vstv %s32
    %v36 = vmul.f32 %v35, %v33
    %v37 = vmul.f32 %v35, %v34
    %v38 = vstv %s31
    %v39 = vadd.f32 %v38, %v36
    %v40 = vadd.f32 %v38, %v37
    %41 = vst [vmem:[#allocation7] sm:$0xff] %v39
    %42 = vst [vmem:[#allocation7 + $0x8] sm:$0xff] %v40
    // Predicated region
    $region18: #{tpu_custom_call.1} parent=1 // pred_check
      _
    $region19: #{tpu_custom_call.1} parent=1 // pred_check_branch
      %44 = sbr.rel (0) target = $region21
    $region20: #{tpu_custom_call.1} parent=1 // pred_region
      %46 = vsyncadd [#allocation6], 0
      %s48 = sshll.u32 [#allocation7], 4
      %s49 = int_to_ptr.vmem [resolvable:$true] %s48
      %s50 = sshll.u32 %s3, 4
      %s51 = int_to_ptr.hbm [resolvable:$true] %s50
      %53 = dma.vmem_to_hbm [thread:$0]  %s49, 256, %s51, [#allocation6]
    $region21: #{tpu_custom_call.1} parent=1 // pred_fallthru
      _
    // Predicated region
    $region22: #{tpu_custom_call.1} parent=1 // pred_check
      _
    $region23: #{tpu_custom_call.1} parent=1 // pred_check_branch
      %55 = sbr.rel (0) target = $region25
    $region24: #{tpu_custom_call.1} parent=1 // pred_region
      %57 = dma.done [#allocation6], 256
    $region25: #{tpu_custom_call.1} parent=1 // pred_fallthru
      _
    %58 = vsyncpa [#allocation5], 1
    %59 = vsyncpa [#allocation6], 1

</llo_original>
